<compile_context>
chip_gen: v6e
topology: v6e:2x2x1
jax: 0.10.0
libtpu: 0.0.40
codegen_flags: <defaults>
</compile_context>

<pallas_src>
import jax
import jax.numpy as jnp
from jax import lax
from jax.experimental import pallas as pl
from jax.experimental.pallas import tpu as pltpu


def pinn2d_kernel(x_ref, w1_ref, b1_ref, w2_ref, b2_ref,
                  w3_ref, b3_ref, w4_ref, b4_ref, o_ref):
    # x_ref: (TILE, 3).  Weights: (out, in).  Biases: (out, 1).  o_ref: (1, TILE).
    x = x_ref[...]
    # Layer 1: contract the size-3 feature axes (NT matmul) -> (32, TILE),
    # putting the batch on the lane axis for the rest of the network.
    h = lax.dot_general(w1_ref[...], x, (((1,), (1,)), ((), ())),
                        preferred_element_type=jnp.float32) + b1_ref[...]
    h = jnp.tanh(h)
    h = jnp.tanh(jnp.dot(w2_ref[...], h,
                         preferred_element_type=jnp.float32) + b2_ref[...])
    h = jnp.tanh(jnp.dot(w3_ref[...], h,
                         preferred_element_type=jnp.float32) + b3_ref[...])
    y = jnp.dot(w4_ref[...], h,
                preferred_element_type=jnp.float32) + b4_ref[...]
    o_ref[...] = y.astype(o_ref.dtype)


def pinn2d_forward(x, params, *, tile_m=8192):
    """x: (N, 3) float32 collocation points (t, x, y). Returns (N, 1) float32."""
    (w1, b1), (w2, b2), (w3, b3), (w4, b4) = params
    N, d_in = x.shape
    assert d_in == 3

    # ---- grid-count-first tile selection -----------------------------------
    n128 = pl.cdiv(N, 128) * 128
    g = max(2, pl.cdiv(n128, tile_m))       # >= 2 steps: v7x megacore sharding
    tile = pl.cdiv(n128, g * 128) * 128     # round_up(n128 / g, 128)
    tile = max(128, min(tile, n128))
    grid = (pl.cdiv(N, tile),)              # ragged last block handled by Pallas

    # (out, in) weights; (out, 1) bias columns broadcast along the lane axis.
    w1T, w2T, w3T, w4T = w1.T, w2.T, w3.T, w4.T
    b1c, b2c, b3c, b4c = (b.reshape(-1, 1) for b in (b1, b2, b3, b4))

    def whole(arr):
        # Whole-array block, identical for every grid step (fetched once).
        return pl.BlockSpec(arr.shape, lambda i, _nd=arr.ndim: (0,) * _nd)

    n_work = grid[0] * tile
    weight_bytes = 4 * (3 * 32 + 32 * 32 + 32 * 32 + 32 * 1 + 32 + 32 + 32 + 1)
    cost = pl.CostEstimate(
        flops=2 * (3 * 32 + 32 * 32 + 32 * 32 + 32 * 1) * n_work,
        transcendentals=96 * n_work,            # 3 tanh layers x 32 units / point
        bytes_accessed=16 * N + weight_bytes,   # 12 B in + 4 B out per point
    )

    yT = pl.pallas_call(
        pinn2d_kernel,
        out_shape=jax.ShapeDtypeStruct((1, N), jnp.float32),
        grid_spec=pl.GridSpec(
            grid=grid,
            in_specs=[
                pl.BlockSpec((tile, 3), lambda i: (i, 0)),   # x rows for step i
                whole(w1T), whole(b1c),
                whole(w2T), whole(b2c),
                whole(w3T), whole(b3c),
                whole(w4T), whole(b4c),
            ],
            out_specs=pl.BlockSpec((1, tile), lambda i: (0, i)),  # lane-dense
        ),
        compiler_params=pltpu.CompilerParams(
            dimension_semantics=("parallel",)),
        cost_estimate=cost,
    )(x, w1T, b1c, w2T, b2c, w3T, b3c, w4T, b4c)

    return yT.reshape(N, 1)


def init_params(key):
    """Deterministic init matching nn.Linear shapes.

    Stored as (in, out) so the reference math is x @ W + b (transpose of
    torch's (out, in))."""
    sizes = [(3, 32), (32, 32), (32, 32), (32, 1)]
    params = []
    for fan_in, fan_out in sizes:
        key, kw, kb = jax.random.split(key, 3)
        bound = 1.0 / jnp.sqrt(jnp.float32(fan_in))
        w = jax.random.uniform(kw, (fan_in, fan_out), jnp.float32, -bound, bound)
        b = jax.random.uniform(kb, (fan_out,), jnp.float32, -bound, bound)
        params.append((w, b))
    return params


def reference_forward(x, params):
    h = x
    for i, (w, b) in enumerate(params):
        h = h @ w + b
        if i < len(params) - 1:
            h = jnp.tanh(h)
    return h


if __name__ == "__main__":
    key = jax.random.PRNGKey(0)
    kp, kx = jax.random.split(key)
    params = init_params(kp)

    # Tile-aligned batch of collocation points (t, x, y).
    N = 256
    x = jax.random.uniform(kx, (N, 3), jnp.float32)
    out = jax.block_until_ready(pinn2d_forward(x, params))
    ref = reference_forward(x, params)
    assert out.shape == (N, 1)
    assert jnp.allclose(out, ref, atol=1e-4, rtol=1e-4), "mismatch vs reference"

    # Ragged batch: exercises the partial last block (input OOB rows padded,
    # output OOB columns discarded) and the >=2-step parallel grid.
    N2 = 300
    x2 = jax.random.uniform(jax.random.PRNGKey(1), (N2, 3), jnp.float32)
    out2 = jax.block_until_ready(pinn2d_forward(x2, params))
    ref2 = reference_forward(x2, params)
    assert out2.shape == (N2, 1)
    assert jnp.allclose(out2, ref2, atol=1e-4, rtol=1e-4), "ragged mismatch"

    print("KERNEL_OK")
</pallas_src>

<mosaic_0001>
module attributes {stable_mosaic.version = 11 : i64} {
  func.func @pinn2d_kernel(%arg0: i32, %arg1: memref<128x3xf32, #tpu.memory_space<vmem>>, %arg2: memref<32x3xf32, #tpu.memory_space<vmem>>, %arg3: memref<32x1xf32, #tpu.memory_space<vmem>>, %arg4: memref<32x32xf32, #tpu.memory_space<vmem>>, %arg5: memref<32x1xf32, #tpu.memory_space<vmem>>, %arg6: memref<32x32xf32, #tpu.memory_space<vmem>>, %arg7: memref<32x1xf32, #tpu.memory_space<vmem>>, %arg8: memref<1x32xf32, #tpu.memory_space<vmem>>, %arg9: memref<1x1xf32, #tpu.memory_space<vmem>>, %arg10: memref<1x128xf32, #tpu.memory_space<vmem>>) attributes {dimension_semantics = [#tpu.dimension_semantics<parallel>], iteration_bounds = array<i64: 2>, scalar_prefetch = 0 : i64, scratch_operands = 0 : i64, tpu.core_type = #tpu.core_type<tc>, window_params = [{transform_indices = @transform_0, window_bounds = array<i64: 128, 3>}, {pipeline_mode = #tpu.pipeline_mode<synchronous>, transform_indices = @transform_1, window_bounds = array<i64: 32, 3>}, {pipeline_mode = #tpu.pipeline_mode<synchronous>, transform_indices = @transform_2, window_bounds = array<i64: 32, 1>}, {pipeline_mode = #tpu.pipeline_mode<synchronous>, transform_indices = @transform_3, window_bounds = array<i64: 32, 32>}, {pipeline_mode = #tpu.pipeline_mode<synchronous>, transform_indices = @transform_4, window_bounds = array<i64: 32, 1>}, {pipeline_mode = #tpu.pipeline_mode<synchronous>, transform_indices = @transform_5, window_bounds = array<i64: 32, 32>}, {pipeline_mode = #tpu.pipeline_mode<synchronous>, transform_indices = @transform_6, window_bounds = array<i64: 32, 1>}, {pipeline_mode = #tpu.pipeline_mode<synchronous>, transform_indices = @transform_7, window_bounds = array<i64: 1, 32>}, {pipeline_mode = #tpu.pipeline_mode<synchronous>, transform_indices = @transform_8, window_bounds = array<i64: 1, 1>}, {transform_indices = @transform_9, window_bounds = array<i64: 1, 128>}]} {
    %c0 = arith.constant 0 : index
    %c0_0 = arith.constant 0 : index
    %0 = vector.load %arg1[%c0, %c0_0] : memref<128x3xf32, #tpu.memory_space<vmem>>, vector<128x3xf32>
    %c0_1 = arith.constant 0 : index
    %c0_2 = arith.constant 0 : index
    %1 = vector.load %arg2[%c0_1, %c0_2] : memref<32x3xf32, #tpu.memory_space<vmem>>, vector<32x3xf32>
    %cst = arith.constant dense<0.000000e+00> : vector<32x128xf32>
    %2 = tpu.matmul %1, %0, %cst {dimension_numbers = #tpu.dot_dimension_numbers<[1], [1], [0], [0], [0, 0, 1, 0], [], []>} : vector<32x3xf32>, vector<128x3xf32>, vector<32x128xf32> -> vector<32x128xf32>
    %c0_3 = arith.constant 0 : index
    %c0_4 = arith.constant 0 : index
    %3 = vector.load %arg3[%c0_3, %c0_4] : memref<32x1xf32, #tpu.memory_space<vmem>>, vector<32x1xf32>
    %4 = vector.broadcast %3 : vector<32x1xf32> to vector<32x128xf32>
    %5 = arith.addf %2, %4 : vector<32x128xf32>
    %6 = math.tanh %5 : vector<32x128xf32>
    %c0_5 = arith.constant 0 : index
    %c0_6 = arith.constant 0 : index
    %7 = vector.load %arg4[%c0_5, %c0_6] : memref<32x32xf32, #tpu.memory_space<vmem>>, vector<32x32xf32>
    %cst_7 = arith.constant dense<0.000000e+00> : vector<32x128xf32>
    %8 = tpu.matmul %7, %6, %cst_7 {dimension_numbers = #tpu.dot_dimension_numbers<[1], [0], [0], [1], [0, 0, 1, 1], [], []>} : vector<32x32xf32>, vector<32x128xf32>, vector<32x128xf32> -> vector<32x128xf32>
    %c0_8 = arith.constant 0 : index
    %c0_9 = arith.constant 0 : index
    %9 = vector.load %arg5[%c0_8, %c0_9] : memref<32x1xf32, #tpu.memory_space<vmem>>, vector<32x1xf32>
    %10 = vector.broadcast %9 : vector<32x1xf32> to vector<32x128xf32>
    %11 = arith.addf %8, %10 : vector<32x128xf32>
    %12 = math.tanh %11 : vector<32x128xf32>
    %c0_10 = arith.constant 0 : index
    %c0_11 = arith.constant 0 : index
    %13 = vector.load %arg6[%c0_10, %c0_11] : memref<32x32xf32, #tpu.memory_space<vmem>>, vector<32x32xf32>
    %cst_12 = arith.constant dense<0.000000e+00> : vector<32x128xf32>
    %14 = tpu.matmul %13, %12, %cst_12 {dimension_numbers = #tpu.dot_dimension_numbers<[1], [0], [0], [1], [0, 0, 1, 1], [], []>} : vector<32x32xf32>, vector<32x128xf32>, vector<32x128xf32> -> vector<32x128xf32>
    %c0_13 = arith.constant 0 : index
    %c0_14 = arith.constant 0 : index
    %15 = vector.load %arg7[%c0_13, %c0_14] : memref<32x1xf32, #tpu.memory_space<vmem>>, vector<32x1xf32>
    %16 = vector.broadcast %15 : vector<32x1xf32> to vector<32x128xf32>
    %17 = arith.addf %14, %16 : vector<32x128xf32>
    %18 = math.tanh %17 : vector<32x128xf32>
    %c0_15 = arith.constant 0 : index
    %c0_16 = arith.constant 0 : index
    %19 = vector.load %arg8[%c0_15, %c0_16] : memref<1x32xf32, #tpu.memory_space<vmem>>, vector<1x32xf32>
    %cst_17 = arith.constant dense<0.000000e+00> : vector<1x128xf32>
    %20 = tpu.matmul %19, %18, %cst_17 {dimension_numbers = #tpu.dot_dimension_numbers<[1], [0], [0], [1], [0, 0, 1, 1], [], []>} : vector<1x32xf32>, vector<32x128xf32>, vector<1x128xf32> -> vector<1x128xf32>
    %c0_18 = arith.constant 0 : index
    %c0_19 = arith.constant 0 : index
    %21 = vector.load %arg9[%c0_18, %c0_19] : memref<1x1xf32, #tpu.memory_space<vmem>>, vector<1x1xf32>
    %22 = vector.broadcast %21 : vector<1x1xf32> to vector<1x128xf32>
    %23 = arith.addf %20, %22 : vector<1x128xf32>
    %c0_20 = arith.constant 0 : index
    %c0_21 = arith.constant 0 : index
    %24 = vector.load %arg10[%c0_20, %c0_21] : memref<1x128xf32, #tpu.memory_space<vmem>>, vector<1x128xf32>
    tpu.vector_store %arg10[%c0_20, %c0_21], %23 {strides = array<i32>} : memref<1x128xf32, #tpu.memory_space<vmem>>, vector<1x128xf32>,
    return
  }
  func.func @transform_0(%arg0: i32) -> (i32, i32) {
    %c0_i32 = arith.constant 0 : i32
    %c0_i32_0 = arith.constant 0 : i32
    return %arg0, %c0_i32 : i32, i32
  }
  func.func @transform_1(%arg0: i32) -> (i32, i32) {
    %c0_i32 = arith.constant 0 : i32
    %c0_i32_0 = arith.constant 0 : i32
    %c0_i32_1 = arith.constant 0 : i32
    return %c0_i32, %c0_i32_0 : i32, i32
  }
  func.func @transform_2(%arg0: i32) -> (i32, i32) {
    %c0_i32 = arith.constant 0 : i32
    %c0_i32_0 = arith.constant 0 : i32
    %c0_i32_1 = arith.constant 0 : i32
    return %c0_i32, %c0_i32_0 : i32, i32
  }
  func.func @transform_3(%arg0: i32) -> (i32, i32) {
    %c0_i32 = arith.constant 0 : i32
    %c0_i32_0 = arith.constant 0 : i32
    %c0_i32_1 = arith.constant 0 : i32
    return %c0_i32, %c0_i32_0 : i32, i32
  }
  func.func @transform_4(%arg0: i32) -> (i32, i32) {
    %c0_i32 = arith.constant 0 : i32
    %c0_i32_0 = arith.constant 0 : i32
    %c0_i32_1 = arith.constant 0 : i32
    return %c0_i32, %c0_i32_0 : i32, i32
  }
  func.func @transform_5(%arg0: i32) -> (i32, i32) {
    %c0_i32 = arith.constant 0 : i32
    %c0_i32_0 = arith.constant 0 : i32
    %c0_i32_1 = arith.constant 0 : i32
    return %c0_i32, %c0_i32_0 : i32, i32
  }
  func.func @transform_6(%arg0: i32) -> (i32, i32) {
    %c0_i32 = arith.constant 0 : i32
    %c0_i32_0 = arith.constant 0 : i32
    %c0_i32_1 = arith.constant 0 : i32
    return %c0_i32, %c0_i32_0 : i32, i32
  }
  func.func @transform_7(%arg0: i32) -> (i32, i32) {
    %c0_i32 = arith.constant 0 : i32
    %c0_i32_0 = arith.constant 0 : i32
    %c0_i32_1 = arith.constant 0 : i32
    return %c0_i32, %c0_i32_0 : i32, i32
  }
  func.func @transform_8(%arg0: i32) -> (i32, i32) {
    %c0_i32 = arith.constant 0 : i32
    %c0_i32_0 = arith.constant 0 : i32
    %c0_i32_1 = arith.constant 0 : i32
    return %c0_i32, %c0_i32_0 : i32, i32
  }
  func.func @transform_9(%arg0: i32) -> (i32, i32) {
    %c0_i32 = arith.constant 0 : i32
    %c0_i32_0 = arith.constant 0 : i32
    return %c0_i32, %arg0 : i32, i32
  }
}

</mosaic_0001>

<llo_original>
// kernel: tpu_custom_call.1
$region0: #{tpu_custom_call.1}
  #allocation0 [shape = 'u32[]', space=smem, size = 0x4, offset = 0x4, fixed_abs, tag = 'smem constant byte address 0x4 - core index']
  #allocation1 [shape = 'u32[144,128]{1,0:T(1,128)}', space=vmem, size = 0x12000, scoped, tag = 'internal scratch']
  #allocation2 [shape = 'f32[1,1]{1,0:T(1,128)S(1)}', space=vmem, size = 0x200, scoped, tag = 'scoped memory for tpu_custom_call.1']
  %s0 = inlined_call_operand.vmem [shape: f32[256,3], index: 0, kind: input, shape index: {}]
  %s1 = inlined_call_operand.vmem [shape: f32[32,3], index: 1, kind: input, shape index: {}]
  %s2 = inlined_call_operand.vmem [shape: f32[32,1], index: 2, kind: input, shape index: {}]
  %s3 = inlined_call_operand.vmem [shape: f32[32,32], index: 3, kind: input, shape index: {}]
  %s4 = inlined_call_operand.vmem [shape: f32[32,1], index: 4, kind: input, shape index: {}]
  %s5 = inlined_call_operand.vmem [shape: f32[32,32], index: 5, kind: input, shape index: {}]
  %s6 = inlined_call_operand.vmem [shape: f32[32,1], index: 6, kind: input, shape index: {}]
  %s7 = inlined_call_operand.vmem [shape: f32[1,32], index: 7, kind: input, shape index: {}]
  %s8 = inlined_call_operand.<no memory space> [shape: f32[1,1], index: 8, kind: input, shape index: {}]
  %s9 = inlined_call_operand.hbm [shape: f32[1,256], index: 9, kind: output, shape index: {}]
  %s10 = sld [smem:[#allocation0]]
  $region69: #{tpu_custom_call.1} parent=0
    _
  %s12 = ssub.s32 1, %s10
  %s13 = scalar_select 0, %s12, %s10
  %v14 = vstv %s8
  %15 = vst [vmem:[#allocation2] sm:$0x1] %v14
  $region1: #{tpu_custom_call.1} parent=0
    #allocation3 [shape = 'u8[1024]{0}', space=vmem, size = 0x400, scoped, tag = 'output window, operand 0']
    #allocation4 [shape = 's32[2]{0}', space=sflag, size = 0x8, scoped, tag = 'scoped memory for tpu_custom_call.1']
    %16 = vsyncpa [#allocation4], 0
    %s17 = scalar_lea.sflag [#allocation4], 1
    %18 = vsyncpa %s17, 0
    loop: start=0, step=1, limit=4
    $region2: #{tpu_custom_call.1} parent=1 // loop_pre_header
      _
    $region3: #{tpu_custom_call.1} parent=1 // loop_header
      %s20 = sphi 0, %s24
      %p21 = scmp.ge.s32.totalorder %s20, 4
      %s30 = sphi 0, %s32
      %s33 = sphi 0, %s30
      %s34 = sphi 0, %s33
      %s50 = sphi 0, %s34
      %s54 = sphi 0, %s54
      %s56 = sphi 0, %s54
      %s57 = sphi 0, %s56
      %s71 = sphi 0, %s57
      %s75 = sphi 0, %s75
      %s77 = sphi 0, %s75
      %s78 = sphi 0, %s77
      %s92 = sphi 0, %s78
      %s96 = sphi 0, %s96
      %s98 = sphi 0, %s96
      %s99 = sphi 0, %s98
      %s113 = sphi 0, %s99
      %s117 = sphi 0, %s117
      %s119 = sphi 0, %s117
      %s120 = sphi 0, %s119
      %s134 = sphi 0, %s120
      %s138 = sphi 0, %s138
      %s140 = sphi 0, %s138
      %s141 = sphi 0, %s140
      %s155 = sphi 0, %s141
      %s159 = sphi 0, %s159
      %s161 = sphi 0, %s159
      %s162 = sphi 0, %s161
      %s176 = sphi 0, %s162
      %s180 = sphi 0, %s180
      %s182 = sphi 0, %s180
      %s183 = sphi 0, %s182
      %s197 = sphi 0, %s183
      %s201 = sphi 0, %s201
      %s203 = sphi 0, %s201
      %s204 = sphi 0, %s203
      %s218 = sphi 0, %s204
      %s224 = sphi 0, %s226
      %s227 = sphi 0, %s224
      %s228 = sphi 0, %s227
      %s244 = sphi 0, %s228
    $region4: #{tpu_custom_call.1} parent=1 // loop_header_branch
      %23 = sbr.rel (%p21) target = $region8
    $region5: #{tpu_custom_call.1} parent=1 // loop_body
      %s25 = ssub.s32 %s20, 1
      %s26 = ssub.s32 %s20, 2
      %s27 = sadd.s32 %s20, 1
      %s28 = ssub.s32 %s20, %s27
      %p29 = scmp.eq.s32.totalorder %s28, 0
      %s31 = sadd.s32 %s30, 1
      %s32 = scalar_select %p29, %s30, %s31
      %p35 = pneg %p29
      %p36 = scmp.eq.s32.totalorder %s20, 1
      %p37 = por %p35, %p36
      %p38 = scmp.ne.s32.totalorder %s30, %s33
      %p39 = scmp.eq.s32.totalorder %s20, 0
      %p40 = por %p38, %p39
      %p41 = scmp.ne.s32.totalorder %s30, %s33
      %p42 = scmp.eq.s32.totalorder %s25, 1
      %p43 = por %p41, %p42
      %p44 = scmp.ne.s32.totalorder %s33, %s34
      %p45 = scmp.eq.s32.totalorder %s25, 0
      %p46 = por %p44, %p45
      %p47 = scmp.ne.s32.totalorder %s33, %s34
      %p48 = scmp.eq.s32.totalorder %s26, 1
      %p49 = por %p47, %p48
      %p51 = scmp.ne.s32.totalorder %s34, %s50
      %p52 = scmp.eq.s32.totalorder %s26, 0
      %p53 = por %p51, %p52
      %s55 = sadd.s32 %s54, 1
      %p58 = scmp.eq.s32.totalorder %s20, 1
      %p59 = scmp.ne.s32.totalorder %s54, %s56
      %p60 = scmp.eq.s32.totalorder %s20, 0
      %p61 = por %p59, %p60
      %p62 = scmp.ne.s32.totalorder %s54, %s56
      %p63 = scmp.eq.s32.totalorder %s25, 1
      %p64 = por %p62, %p63
      %p65 = scmp.ne.s32.totalorder %s56, %s57
      %p66 = scmp.eq.s32.totalorder %s25, 0
      %p67 = por %p65, %p66
      %p68 = scmp.ne.s32.totalorder %s56, %s57
      %p69 = scmp.eq.s32.totalorder %s26, 1
      %p70 = por %p68, %p69
      %p72 = scmp.ne.s32.totalorder %s57, %s71
      %p73 = scmp.eq.s32.totalorder %s26, 0
      %p74 = por %p72, %p73
      %s76 = sadd.s32 %s75, 1
      %p79 = scmp.eq.s32.totalorder %s20, 1
      %p80 = scmp.ne.s32.totalorder %s75, %s77
      %p81 = scmp.eq.s32.totalorder %s20, 0
      %p82 = por %p80, %p81
      %p83 = scmp.ne.s32.totalorder %s75, %s77
      %p84 = scmp.eq.s32.totalorder %s25, 1
      %p85 = por %p83, %p84
      %p86 = scmp.ne.s32.totalorder %s77, %s78
      %p87 = scmp.eq.s32.totalorder %s25, 0
      %p88 = por %p86, %p87
      %p89 = scmp.ne.s32.totalorder %s77, %s78
      %p90 = scmp.eq.s32.totalorder %s26, 1
      %p91 = por %p89, %p90
      %p93 = scmp.ne.s32.totalorder %s78, %s92
      %p94 = scmp.eq.s32.totalorder %s26, 0
      %p95 = por %p93, %p94
      %s97 = sadd.s32 %s96, 1
      %p100 = scmp.eq.s32.totalorder %s20, 1
      %p101 = scmp.ne.s32.totalorder %s96, %s98
      %p102 = scmp.eq.s32.totalorder %s20, 0
      %p103 = por %p101, %p102
      %p104 = scmp.ne.s32.totalorder %s96, %s98
      %p105 = scmp.eq.s32.totalorder %s25, 1
      %p106 = por %p104, %p105
      %p107 = scmp.ne.s32.totalorder %s98, %s99
      %p108 = scmp.eq.s32.totalorder %s25, 0
      %p109 = por %p107, %p108
      %p110 = scmp.ne.s32.totalorder %s98, %s99
      %p111 = scmp.eq.s32.totalorder %s26, 1
      %p112 = por %p110, %p111
      %p114 = scmp.ne.s32.totalorder %s99, %s113
      %p115 = scmp.eq.s32.totalorder %s26, 0
      %p116 = por %p114, %p115
      %s118 = sadd.s32 %s117, 1
      %p121 = scmp.eq.s32.totalorder %s20, 1
      %p122 = scmp.ne.s32.totalorder %s117, %s119
      %p123 = scmp.eq.s32.totalorder %s20, 0
      %p124 = por %p122, %p123
      %p125 = scmp.ne.s32.totalorder %s117, %s119
      %p126 = scmp.eq.s32.totalorder %s25, 1
      %p127 = por %p125, %p126
      %p128 = scmp.ne.s32.totalorder %s119, %s120
      %p129 = scmp.eq.s32.totalorder %s25, 0
      %p130 = por %p128, %p129
      %p131 = scmp.ne.s32.totalorder %s119, %s120
      %p132 = scmp.eq.s32.totalorder %s26, 1
      %p133 = por %p131, %p132
      %p135 = scmp.ne.s32.totalorder %s120, %s134
      %p136 = scmp.eq.s32.totalorder %s26, 0
      %p137 = por %p135, %p136
      %s139 = sadd.s32 %s138, 1
      %p142 = scmp.eq.s32.totalorder %s20, 1
      %p143 = scmp.ne.s32.totalorder %s138, %s140
      %p144 = scmp.eq.s32.totalorder %s20, 0
      %p145 = por %p143, %p144
      %p146 = scmp.ne.s32.totalorder %s138, %s140
      %p147 = scmp.eq.s32.totalorder %s25, 1
      %p148 = por %p146, %p147
      %p149 = scmp.ne.s32.totalorder %s140, %s141
      %p150 = scmp.eq.s32.totalorder %s25, 0
      %p151 = por %p149, %p150
      %p152 = scmp.ne.s32.totalorder %s140, %s141
      %p153 = scmp.eq.s32.totalorder %s26, 1
      %p154 = por %p152, %p153
      %p156 = scmp.ne.s32.totalorder %s141, %s155
      %p157 = scmp.eq.s32.totalorder %s26, 0
      %p158 = por %p156, %p157
      %s160 = sadd.s32 %s159, 1
      %p163 = scmp.eq.s32.totalorder %s20, 1
      %p164 = scmp.ne.s32.totalorder %s159, %s161
      %p165 = scmp.eq.s32.totalorder %s20, 0
      %p166 = por %p164, %p165
      %p167 = scmp.ne.s32.totalorder %s159, %s161
      %p168 = scmp.eq.s32.totalorder %s25, 1
      %p169 = por %p167, %p168
      %p170 = scmp.ne.s32.totalorder %s161, %s162
      %p171 = scmp.eq.s32.totalorder %s25, 0
      %p172 = por %p170, %p171
      %p173 = scmp.ne.s32.totalorder %s161, %s162
      %p174 = scmp.eq.s32.totalorder %s26, 1
      %p175 = por %p173, %p174
      %p177 = scmp.ne.s32.totalorder %s162, %s176
      %p178 = scmp.eq.s32.totalorder %s26, 0
      %p179 = por %p177, %p178
      %s181 = sadd.s32 %s180, 1
      %p184 = scmp.eq.s32.totalorder %s20, 1
      %p185 = scmp.ne.s32.totalorder %s180, %s182
      %p186 = scmp.eq.s32.totalorder %s20, 0
      %p187 = por %p185, %p186
      %p188 = scmp.ne.s32.totalorder %s180, %s182
      %p189 = scmp.eq.s32.totalorder %s25, 1
      %p190 = por %p188, %p189
      %p191 = scmp.ne.s32.totalorder %s182, %s183
      %p192 = scmp.eq.s32.totalorder %s25, 0
      %p193 = por %p191, %p192
      %p194 = scmp.ne.s32.totalorder %s182, %s183
      %p195 = scmp.eq.s32.totalorder %s26, 1
      %p196 = por %p194, %p195
      %p198 = scmp.ne.s32.totalorder %s183, %s197
      %p199 = scmp.eq.s32.totalorder %s26, 0
      %p200 = por %p198, %p199
      %s202 = sadd.s32 %s201, 1
      %p205 = scmp.eq.s32.totalorder %s20, 1
      %p206 = scmp.ne.s32.totalorder %s201, %s203
      %p207 = scmp.eq.s32.totalorder %s20, 0
      %p208 = por %p206, %p207
      %p209 = scmp.ne.s32.totalorder %s201, %s203
      %p210 = scmp.eq.s32.totalorder %s25, 1
      %p211 = por %p209, %p210
      %p212 = scmp.ne.s32.totalorder %s203, %s204
      %p213 = scmp.eq.s32.totalorder %s25, 0
      %p214 = por %p212, %p213
      %p215 = scmp.ne.s32.totalorder %s203, %s204
      %p216 = scmp.eq.s32.totalorder %s26, 1
      %p217 = por %p215, %p216
      %p219 = scmp.ne.s32.totalorder %s204, %s218
      %p220 = scmp.eq.s32.totalorder %s26, 0
      %p221 = por %p219, %p220
      %s222 = ssub.s32 %s20, %s27
      %p223 = scmp.eq.s32.totalorder %s222, 0
      %s225 = sadd.s32 %s224, 1
      %s226 = scalar_select %p223, %s224, %s225
      %p229 = pneg %p223
      %p230 = scmp.eq.s32.totalorder %s20, 1
      %p231 = por %p229, %p230
      %p232 = scmp.ne.s32.totalorder %s224, %s227
      %p233 = scmp.eq.s32.totalorder %s20, 0
      %p234 = por %p232, %p233
      %p235 = scmp.ne.s32.totalorder %s224, %s227
      %p236 = scmp.eq.s32.totalorder %s25, 1
      %p237 = por %p235, %p236
      %p238 = scmp.ne.s32.totalorder %s227, %s228
      %p239 = scmp.eq.s32.totalorder %s25, 0
      %p240 = por %p238, %p239
      %p241 = scmp.ne.s32.totalorder %s227, %s228
      %p242 = scmp.eq.s32.totalorder %s26, 1
      %p243 = por %p241, %p242
      %p245 = scmp.ne.s32.totalorder %s228, %s244
      %p246 = scmp.eq.s32.totalorder %s26, 0
      %p247 = por %p245, %p246
      %p248 = scmp.le.s32.totalorder 1, %s20
      %p249 = scmp.lt.s32.totalorder %s20, 3
      %p250 = pnand %p248, %p249
      %p251 = pneg %p250
      // Predicated region
      $region9: #{tpu_custom_call.1} parent=5 // pred_check
        _
      $region10: #{tpu_custom_call.1} parent=5 // pred_check_branch
        %253 = sbr.rel (%p250) target = $region12
      $region11: #{tpu_custom_call.1} parent=5 // pred_region
        %s254 = ssub.s32 %s20, 1
        // Predicated region
        $region13: #{tpu_custom_call.1} parent=11 // pred_check
          %p255 = pneg %p67
        $region14: #{tpu_custom_call.1} parent=11 // pred_check_branch
          %257 = sbr.rel (%p255) target = $region16
        $region15: #{tpu_custom_call.1} parent=11 // pred_region
          _
        $region16: #{tpu_custom_call.1} parent=11 // pred_fallthru
          _
        // Predicated region
        $region17: #{tpu_custom_call.1} parent=11 // pred_check
          %p258 = pneg %p88
        $region18: #{tpu_custom_call.1} parent=11 // pred_check_branch
          %260 = sbr.rel (%p258) target = $region20
        $region19: #{tpu_custom_call.1} parent=11 // pred_region
          _
        $region20: #{tpu_custom_call.1} parent=11 // pred_fallthru
          _
        // Predicated region
        $region21: #{tpu_custom_call.1} parent=11 // pred_check
          %p261 = pneg %p109
        $region22: #{tpu_custom_call.1} parent=11 // pred_check_branch
          %263 = sbr.rel (%p261) target = $region24
        $region23: #{tpu_custom_call.1} parent=11 // pred_region
          _
        $region24: #{tpu_custom_call.1} parent=11 // pred_fallthru
          _
        // Predicated region
        $region25: #{tpu_custom_call.1} parent=11 // pred_check
          %p264 = pneg %p130
        $region26: #{tpu_custom_call.1} parent=11 // pred_check_branch
          %266 = sbr.rel (%p264) target = $region28
        $region27: #{tpu_custom_call.1} parent=11 // pred_region
          _
        $region28: #{tpu_custom_call.1} parent=11 // pred_fallthru
          _
        // Predicated region
        $region29: #{tpu_custom_call.1} parent=11 // pred_check
          %p267 = pneg %p151
        $region30: #{tpu_custom_call.1} parent=11 // pred_check_branch
          %269 = sbr.rel (%p267) target = $region32
        $region31: #{tpu_custom_call.1} parent=11 // pred_region
          _
        $region32: #{tpu_custom_call.1} parent=11 // pred_fallthru
          _
        // Predicated region
        $region33: #{tpu_custom_call.1} parent=11 // pred_check
          %p270 = pneg %p172
        $region34: #{tpu_custom_call.1} parent=11 // pred_check_branch
          %272 = sbr.rel (%p270) target = $region36
        $region35: #{tpu_custom_call.1} parent=11 // pred_region
          _
        $region36: #{tpu_custom_call.1} parent=11 // pred_fallthru
          _
        // Predicated region
        $region37: #{tpu_custom_call.1} parent=11 // pred_check
          %p273 = pneg %p193
        $region38: #{tpu_custom_call.1} parent=11 // pred_check_branch
          %275 = sbr.rel (%p273) target = $region40
        $region39: #{tpu_custom_call.1} parent=11 // pred_region
          _
        $region40: #{tpu_custom_call.1} parent=11 // pred_fallthru
          _
        // Predicated region
        $region41: #{tpu_custom_call.1} parent=11 // pred_check
          %p276 = pneg %p214
        $region42: #{tpu_custom_call.1} parent=11 // pred_check_branch
          %278 = sbr.rel (%p276) target = $region44
        $region43: #{tpu_custom_call.1} parent=11 // pred_region
          _
        $region44: #{tpu_custom_call.1} parent=11 // pred_fallthru
          _
      $region12: #{tpu_custom_call.1} parent=5 // pred_fallthru
        _
      %p279 = scmp.lt.s32.totalorder %s20, 2
      // Predicated region
      $region45: #{tpu_custom_call.1} parent=5 // pred_check
        %p280 = pneg %p279
      $region46: #{tpu_custom_call.1} parent=5 // pred_check_branch
        %282 = sbr.rel (%p280) target = $region48
      $region47: #{tpu_custom_call.1} parent=5 // pred_region
        // Predicated region
        $region49: #{tpu_custom_call.1} parent=47 // pred_check
          %p283 = pneg %p40
        $region50: #{tpu_custom_call.1} parent=47 // pred_check_branch
          %285 = sbr.rel (%p283) target = $region52
        $region51: #{tpu_custom_call.1} parent=47 // pred_region
          %s286 = smul.u32 16, %s20
          %p287 = scmp.lt.s32.totalorder %s286, 31
          %s288 = scalar_select %p287, %s286, 31
          %s289 = smul.addr %s288, 8
          %s290 = scalar_lea.vmem %s0, %s289
          %s291 = smul.u32 16, %s20
        $region52: #{tpu_custom_call.1} parent=47 // pred_fallthru
          _
      $region48: #{tpu_custom_call.1} parent=5 // pred_fallthru
        _
      %p292 = scmp.le.s32.totalorder 1, %s20
      %p293 = scmp.lt.s32.totalorder %s20, 3
      %p294 = pnand %p292, %p293
      %p295 = pneg %p294
      // Predicated region
      $region53: #{tpu_custom_call.1} parent=5 // pred_check
        _
      $region54: #{tpu_custom_call.1} parent=5 // pred_check_branch
        %297 = sbr.rel (%p294) target = $region56
      $region55: #{tpu_custom_call.1} parent=5 // pred_region
        %s298 = ssub.s32 %s20, 1
        %s299 = smul.u32 16, %s25
        %p300 = scmp.lt.s32.totalorder %s299, 31
        %s301 = scalar_select %p300, %s299, 31
        %s302 = smul.addr %s301, 8
        %s303 = scalar_lea.vmem %s0, %s302
        %p304 = pneg %p46
        %p305 = pneg %p43
        %p306 = pneg %p67
        %p307 = pneg %p64
        %p308 = pneg %p88
        %p309 = pneg %p85
        %p310 = pneg %p109
        %p311 = pneg %p106
        %p312 = pneg %p130
        %p313 = pneg %p127
        %p314 = pneg %p151
        %p315 = pneg %p148
        %p316 = pneg %p172
        %p317 = pneg %p169
        %p318 = pneg %p193
        %p319 = pneg %p190
        %p320 = pneg %p214
        %p321 = pneg %p211
        %p322 = pneg %p240
        %p323 = pneg %p237
        %s324 = sand.u32 %s227, 1
        %s325 = scalar_lea.sflag [#allocation4], %s324
        %s326 = sand.u32 %s227, 1
        %s327 = scalar_lea.vmem [#allocation3], %s326
        %s328 = smul.u32 16, %s25
        %p329 = scmp.lt.s32.totalorder %s328, 31
        %s330 = scalar_select %p329, %s328, 31
        %s331 = smul.addr %s330, 8
        %s332 = scalar_lea.vmem %s0, %s331
        %s333 = smul.u32 16, %s25
        %v334 = vld [vmem:[%s332] sm:$0xff]
        %v335 = vld [vmem:[%s332 + $0x8] sm:$0xff]
        %v336 = vld [vmem:[%s332 + $0x10] sm:$0xff]
        %v337 = vld [vmem:[%s332 + $0x18] sm:$0xff]
        %v338 = vld [vmem:[%s332 + $0x20] sm:$0xff]
        %v339 = vld [vmem:[%s332 + $0x28] sm:$0xff]
        %v340 = vld [vmem:[%s332 + $0x30] sm:$0xff]
        %v341 = vld [vmem:[%s332 + $0x38] sm:$0xff]
        %v342 = vld [vmem:[%s332 + $0x40] sm:$0xff]
        %v343 = vld [vmem:[%s332 + $0x48] sm:$0xff]
        %v344 = vld [vmem:[%s332 + $0x50] sm:$0xff]
        %v345 = vld [vmem:[%s332 + $0x58] sm:$0xff]
        %v346 = vld [vmem:[%s332 + $0x60] sm:$0xff]
        %v347 = vld [vmem:[%s332 + $0x68] sm:$0xff]
        %v348 = vld [vmem:[%s332 + $0x70] sm:$0xff]
        %v349 = vld [vmem:[%s332 + $0x78] sm:$0xff]
        %v350 = vld [vmem:[%s1] sm:$0xff]
        %v351 = vld [vmem:[%s1 + $0x8] sm:$0xff]
        %v352 = vld [vmem:[%s1 + $0x10] sm:$0xff]
        %v353 = vld [vmem:[%s1 + $0x18] sm:$0xff]
        %v354 = vld [vmem:[%s2] sm:$0xff]
        %v355 = vld [vmem:[%s2 + $0x8] sm:$0xff]
        %v356 = vld [vmem:[%s2 + $0x10] sm:$0xff]
        %v357 = vld [vmem:[%s2 + $0x18] sm:$0xff]
        %359 = vset.pattern.permute.xlu0 0
        %360 = vperm.xlu0 %359, %v354
        %v361 = vpop.permute.xlu0 %360
        %364 = vset.pattern.permute.xlu0 0
        %365 = vperm.xlu0 %364, %v355
        %v366 = vpop.permute.xlu0 %365
        %369 = vset.pattern.permute.xlu0 0
        %370 = vperm.xlu0 %369, %v356
        %v371 = vpop.permute.xlu0 %370
        %374 = vset.pattern.permute.xlu0 0
        %375 = vperm.xlu0 %374, %v357
        %v376 = vpop.permute.xlu0 %375
        %vm378 = vcmask 23552
        %v380 = vsel %vm378, %v350, 0
        %v383 = vsel %vm378, %v351, 0
        %v386 = vsel %vm378, %v352, 0
        %v389 = vsel %vm378, %v353, 0
        %v392 = vsel %vm378, %v334, 0
        %v395 = vsel %vm378, %v335, 0
        %v398 = vsel %vm378, %v336, 0
        %v401 = vsel %vm378, %v337, 0
        %v404 = vsel %vm378, %v338, 0
        %v407 = vsel %vm378, %v339, 0
        %v410 = vsel %vm378, %v340, 0
        %v413 = vsel %vm378, %v341, 0
        %v416 = vsel %vm378, %v342, 0
        %v419 = vsel %vm378, %v343, 0
        %v422 = vsel %vm378, %v344, 0
        %v425 = vsel %vm378, %v345, 0
        %v428 = vsel %vm378, %v346, 0
        %v431 = vsel %vm378, %v347, 0
        %v434 = vsel %vm378, %v348, 0
        %v437 = vsel %vm378, %v349, 0
        %439 = vmatprep.subr.mxu0 0.0
        %440 = vmatpush1.xpose.msra.mxu0 %v437
        %441 = vmatprep.subr.mxu0 0.0
        %442 = vmatpush1.xpose.msra.mxu0 %v434
        %443 = vmatprep.subr.mxu0 0.0
        %444 = vmatpush1.xpose.msra.mxu0 %v431
        %445 = vmatprep.subr.mxu0 0.0
        %446 = vmatpush1.xpose.msra.mxu0 %v428
        %447 = vmatprep.subr.mxu0 0.0
        %448 = vmatpush1.xpose.msra.mxu0 %v425
        %449 = vmatprep.subr.mxu0 0.0
        %450 = vmatpush1.xpose.msra.mxu0 %v422
        %451 = vmatprep.subr.mxu0 0.0
        %452 = vmatpush1.xpose.msra.mxu0 %v419
        %453 = vmatprep.subr.mxu0 0.0
        %454 = vmatpush1.xpose.msra.mxu0 %v416
        %455 = vmatprep.subr.mxu0 0.0
        %456 = vmatpush1.xpose.msra.mxu0 %v413
        %457 = vmatprep.subr.mxu0 0.0
        %458 = vmatpush1.xpose.msra.mxu0 %v410
        %459 = vmatprep.subr.mxu0 0.0
        %460 = vmatpush1.xpose.msra.mxu0 %v407
        %461 = vmatprep.subr.mxu0 0.0
        %462 = vmatpush1.xpose.msra.mxu0 %v404
        %463 = vmatprep.subr.mxu0 0.0
        %464 = vmatpush1.xpose.msra.mxu0 %v401
        %465 = vmatprep.subr.mxu0 0.0
        %466 = vmatpush1.xpose.msra.mxu0 %v398
        %467 = vmatprep.subr.mxu0 0.0
        %468 = vmatpush1.xpose.msra.mxu0 %v395
        %469 = vmatprep.subr.mxu0 0.0
        %470 = vmatpush1.xpose.msra.mxu0 %v392
        %471 = vmatprep.subr.mxu0 0.0
        %472 = vmatpush2.xpose.msra.mxu0 0.0
        %473 = vmatprep.subr.mxu0 0.0
        %474 = vmatpush2.xpose.msra.mxu0 0.0
        %475 = vmatprep.subr.mxu0 0.0
        %476 = vmatpush2.xpose.msra.mxu0 0.0
        %477 = vmatprep.subr.mxu0 0.0
        %478 = vmatpush2.xpose.msra.mxu0 0.0
        %479 = vmatprep.subr.mxu0 0.0
        %480 = vmatpush2.xpose.msra.mxu0 0.0
        %481 = vmatprep.subr.mxu0 0.0
        %482 = vmatpush2.xpose.msra.mxu0 0.0
        %483 = vmatprep.subr.mxu0 0.0
        %484 = vmatpush2.xpose.msra.mxu0 0.0
        %485 = vmatprep.subr.mxu0 0.0
        %486 = vmatpush2.xpose.msra.mxu0 0.0
        %487 = vmatprep.subr.mxu0 0.0
        %488 = vmatpush2.xpose.msra.mxu0 0.0
        %489 = vmatprep.subr.mxu0 0.0
        %490 = vmatpush2.xpose.msra.mxu0 0.0
        %491 = vmatprep.subr.mxu0 0.0
        %492 = vmatpush2.xpose.msra.mxu0 0.0
        %493 = vmatprep.subr.mxu0 0.0
        %494 = vmatpush2.xpose.msra.mxu0 0.0
        %495 = vmatprep.subr.mxu0 0.0
        %496 = vmatpush2.xpose.msra.mxu0 0.0
        %497 = vmatprep.subr.mxu0 0.0
        %498 = vmatpush2.xpose.msra.mxu0 0.0
        %499 = vmatprep.subr.mxu0 0.0
        %500 = vmatpush2.xpose.msra.mxu0 0.0
        %501 = vmatprep.subr.mxu0 0.0
        %502 = vmatpush2.xpose.msra.mxu0 0.0
        %503 = vmatprep.mubr.f32.mxu0 0.0
        %504 = vmatmul.mubr.f32.gmra.mxu0 %v380
        %v505 = vpop.f32.mrf.mxu0
        %v506 = vadd.f32 %v361, %v505
        %v507 = vpop.f32.mrf.mxu0
        %508 = vmatprep.mubr.f32.mxu0 0.0
        %509 = vmatmul.mubr.f32.gmra.mxu0 %v383
        %v510 = vpop.f32.mrf.mxu0
        %v511 = vadd.f32 %v366, %v510
        %v512 = vpop.f32.mrf.mxu0
        %513 = vmatprep.mubr.f32.mxu0 0.0
        %514 = vmatmul.mubr.f32.gmra.mxu0 %v386
        %v515 = vpop.f32.mrf.mxu0
        %v516 = vadd.f32 %v371, %v515
        %v517 = vpop.f32.mrf.mxu0
        %518 = vmatprep.mubr.f32.mxu0 0.0
        %519 = vmatmul.mubr.f32.gmra.mxu0 %v389
        %v520 = vpop.f32.mrf.mxu0
        %v521 = vadd.f32 %v376, %v520
        %v522 = vpop.f32.mrf.mxu0
        %523 = vdwg.mxu0
        %v524 = vtanh.pop %v506
        %v525 = vtanh.pop %v511
        %v526 = vtanh.pop %v516
        %v527 = vtanh.pop %v521
        %v528 = vld [vmem:[%s3] sm:$0xff]
        %v529 = vld [vmem:[%s3 + $0x8] sm:$0xff]
        %v530 = vld [vmem:[%s3 + $0x10] sm:$0xff]
        %v531 = vld [vmem:[%s3 + $0x18] sm:$0xff]
        %v532 = vld [vmem:[%s4] sm:$0xff]
        %v533 = vld [vmem:[%s4 + $0x8] sm:$0xff]
        %v534 = vld [vmem:[%s4 + $0x10] sm:$0xff]
        %v535 = vld [vmem:[%s4 + $0x18] sm:$0xff]
        %537 = vset.pattern.permute.xlu0 0
        %538 = vperm.xlu0 %537, %v532
        %v539 = vpop.permute.xlu0 %538
        %542 = vset.pattern.permute.xlu0 0
        %543 = vperm.xlu0 %542, %v533
        %v544 = vpop.permute.xlu0 %543
        %547 = vset.pattern.permute.xlu0 0
        %548 = vperm.xlu0 %547, %v534
        %v549 = vpop.permute.xlu0 %548
        %552 = vset.pattern.permute.xlu0 0
        %553 = vperm.xlu0 %552, %v535
        %v554 = vpop.permute.xlu0 %553
        %vm556 = vcmask 261120
        %v558 = vsel %vm556, %v528, 0
        %v561 = vsel %vm556, %v529, 0
        %v564 = vsel %vm556, %v530, 0
        %v567 = vsel %vm556, %v531, 0
        %569 = vmatprep.subr.mxu0 0.0
        %570 = vmatpush1.msra.mxu0 0.0
        %571 = vmatprep.subr.mxu0 0.0
        %572 = vmatpush1.msra.mxu0 0.0
        %573 = vmatprep.subr.mxu0 0.0
        %574 = vmatpush1.msra.mxu0 0.0
        %575 = vmatprep.subr.mxu0 0.0
        %576 = vmatpush1.msra.mxu0 0.0
        %577 = vmatprep.subr.mxu0 0.0
        %578 = vmatpush1.msra.mxu0 0.0
        %579 = vmatprep.subr.mxu0 0.0
        %580 = vmatpush1.msra.mxu0 0.0
        %581 = vmatprep.subr.mxu0 0.0
        %582 = vmatpush1.msra.mxu0 0.0
        %583 = vmatprep.subr.mxu0 0.0
        %584 = vmatpush1.msra.mxu0 0.0
        %585 = vmatprep.subr.mxu0 0.0
        %586 = vmatpush1.msra.mxu0 0.0
        %587 = vmatprep.subr.mxu0 0.0
        %588 = vmatpush1.msra.mxu0 0.0
        %589 = vmatprep.subr.mxu0 0.0
        %590 = vmatpush1.msra.mxu0 0.0
        %591 = vmatprep.subr.mxu0 0.0
        %592 = vmatpush1.msra.mxu0 0.0
        %593 = vmatprep.subr.mxu0 0.0
        %594 = vmatpush1.msra.mxu0 %v527
        %595 = vmatprep.subr.mxu0 0.0
        %596 = vmatpush1.msra.mxu0 %v526
        %597 = vmatprep.subr.mxu0 0.0
        %598 = vmatpush1.msra.mxu0 %v525
        %599 = vmatprep.subr.mxu0 0.0
        %600 = vmatpush1.msra.mxu0 %v524
        %601 = vmatprep.subr.mxu0 0.0
        %602 = vmatpush2.msra.mxu0 0.0
        %603 = vmatprep.subr.mxu0 0.0
        %604 = vmatpush2.msra.mxu0 0.0
        %605 = vmatprep.subr.mxu0 0.0
        %606 = vmatpush2.msra.mxu0 0.0
        %607 = vmatprep.subr.mxu0 0.0
        %608 = vmatpush2.msra.mxu0 0.0
        %609 = vmatprep.subr.mxu0 0.0
        %610 = vmatpush2.msra.mxu0 0.0
        %611 = vmatprep.subr.mxu0 0.0
        %612 = vmatpush2.msra.mxu0 0.0
        %613 = vmatprep.subr.mxu0 0.0
        %614 = vmatpush2.msra.mxu0 0.0
        %615 = vmatprep.subr.mxu0 0.0
        %616 = vmatpush2.msra.mxu0 0.0
        %617 = vmatprep.subr.mxu0 0.0
        %618 = vmatpush2.msra.mxu0 0.0
        %619 = vmatprep.subr.mxu0 0.0
        %620 = vmatpush2.msra.mxu0 0.0
        %621 = vmatprep.subr.mxu0 0.0
        %622 = vmatpush2.msra.mxu0 0.0
        %623 = vmatprep.subr.mxu0 0.0
        %624 = vmatpush2.msra.mxu0 0.0
        %625 = vmatprep.subr.mxu0 0.0
        %626 = vmatpush2.msra.mxu0 0.0
        %627 = vmatprep.subr.mxu0 0.0
        %628 = vmatpush2.msra.mxu0 0.0
        %629 = vmatprep.subr.mxu0 0.0
        %630 = vmatpush2.msra.mxu0 0.0
        %631 = vmatprep.subr.mxu0 0.0
        %632 = vmatpush2.msra.mxu0 0.0
        %633 = vmatprep.mubr.f32.mxu0 0.0
        %634 = vmatmul.mubr.f32.gmra.mxu0 %v558
        %v635 = vpop.f32.mrf.mxu0
        %v636 = vadd.f32 %v539, %v635
        %v637 = vpop.f32.mrf.mxu0
        %638 = vmatprep.mubr.f32.mxu0 0.0
        %639 = vmatmul.mubr.f32.gmra.mxu0 %v561
        %v640 = vpop.f32.mrf.mxu0
        %v641 = vadd.f32 %v544, %v640
        %v642 = vpop.f32.mrf.mxu0
        %643 = vmatprep.mubr.f32.mxu0 0.0
        %644 = vmatmul.mubr.f32.gmra.mxu0 %v564
        %v645 = vpop.f32.mrf.mxu0
        %v646 = vadd.f32 %v549, %v645
        %v647 = vpop.f32.mrf.mxu0
        %648 = vmatprep.mubr.f32.mxu0 0.0
        %649 = vmatmul.mubr.f32.gmra.mxu0 %v567
        %v650 = vpop.f32.mrf.mxu0
        %v651 = vadd.f32 %v554, %v650
        %v652 = vpop.f32.mrf.mxu0
        %653 = vdwg.mxu0
        %v654 = vtanh.pop %v636
        %v655 = vtanh.pop %v641
        %v656 = vtanh.pop %v646
        %v657 = vtanh.pop %v651
        %v658 = vld [vmem:[%s5] sm:$0xff]
        %v659 = vld [vmem:[%s5 + $0x8] sm:$0xff]
        %v660 = vld [vmem:[%s5 + $0x10] sm:$0xff]
        %v661 = vld [vmem:[%s5 + $0x18] sm:$0xff]
        %v662 = vld [vmem:[%s6] sm:$0xff]
        %v663 = vld [vmem:[%s6 + $0x8] sm:$0xff]
        %v664 = vld [vmem:[%s6 + $0x10] sm:$0xff]
        %v665 = vld [vmem:[%s6 + $0x18] sm:$0xff]
        %667 = vset.pattern.permute.xlu0 0
        %668 = vperm.xlu0 %667, %v662
        %v669 = vpop.permute.xlu0 %668
        %672 = vset.pattern.permute.xlu0 0
        %673 = vperm.xlu0 %672, %v663
        %v674 = vpop.permute.xlu0 %673
        %677 = vset.pattern.permute.xlu0 0
        %678 = vperm.xlu0 %677, %v664
        %v679 = vpop.permute.xlu0 %678
        %682 = vset.pattern.permute.xlu0 0
        %683 = vperm.xlu0 %682, %v665
        %v684 = vpop.permute.xlu0 %683
        %v687 = vsel %vm556, %v658, 0
        %v690 = vsel %vm556, %v659, 0
        %v693 = vsel %vm556, %v660, 0
        %v696 = vsel %vm556, %v661, 0
        %698 = vmatprep.subr.mxu0 0.0
        %699 = vmatpush1.msra.mxu0 0.0
        %700 = vmatprep.subr.mxu0 0.0
        %701 = vmatpush1.msra.mxu0 0.0
        %702 = vmatprep.subr.mxu0 0.0
        %703 = vmatpush1.msra.mxu0 0.0
        %704 = vmatprep.subr.mxu0 0.0
        %705 = vmatpush1.msra.mxu0 0.0
        %706 = vmatprep.subr.mxu0 0.0
        %707 = vmatpush1.msra.mxu0 0.0
        %708 = vmatprep.subr.mxu0 0.0
        %709 = vmatpush1.msra.mxu0 0.0
        %710 = vmatprep.subr.mxu0 0.0
        %711 = vmatpush1.msra.mxu0 0.0
        %712 = vmatprep.subr.mxu0 0.0
        %713 = vmatpush1.msra.mxu0 0.0
        %714 = vmatprep.subr.mxu0 0.0
        %715 = vmatpush1.msra.mxu0 0.0
        %716 = vmatprep.subr.mxu0 0.0
        %717 = vmatpush1.msra.mxu0 0.0
        %718 = vmatprep.subr.mxu0 0.0
        %719 = vmatpush1.msra.mxu0 0.0
        %720 = vmatprep.subr.mxu0 0.0
        %721 = vmatpush1.msra.mxu0 0.0
        %722 = vmatprep.subr.mxu0 0.0
        %723 = vmatpush1.msra.mxu0 %v657
        %724 = vmatprep.subr.mxu0 0.0
        %725 = vmatpush1.msra.mxu0 %v656
        %726 = vmatprep.subr.mxu0 0.0
        %727 = vmatpush1.msra.mxu0 %v655
        %728 = vmatprep.subr.mxu0 0.0
        %729 = vmatpush1.msra.mxu0 %v654
        %730 = vmatprep.subr.mxu0 0.0
        %731 = vmatpush2.msra.mxu0 0.0
        %732 = vmatprep.subr.mxu0 0.0
        %733 = vmatpush2.msra.mxu0 0.0
        %734 = vmatprep.subr.mxu0 0.0
        %735 = vmatpush2.msra.mxu0 0.0
        %736 = vmatprep.subr.mxu0 0.0
        %737 = vmatpush2.msra.mxu0 0.0
        %738 = vmatprep.subr.mxu0 0.0
        %739 = vmatpush2.msra.mxu0 0.0
        %740 = vmatprep.subr.mxu0 0.0
        %741 = vmatpush2.msra.mxu0 0.0
        %742 = vmatprep.subr.mxu0 0.0
        %743 = vmatpush2.msra.mxu0 0.0
        %744 = vmatprep.subr.mxu0 0.0
        %745 = vmatpush2.msra.mxu0 0.0
        %746 = vmatprep.subr.mxu0 0.0
        %747 = vmatpush2.msra.mxu0 0.0
        %748 = vmatprep.subr.mxu0 0.0
        %749 = vmatpush2.msra.mxu0 0.0
        %750 = vmatprep.subr.mxu0 0.0
        %751 = vmatpush2.msra.mxu0 0.0
        %752 = vmatprep.subr.mxu0 0.0
        %753 = vmatpush2.msra.mxu0 0.0
        %754 = vmatprep.subr.mxu0 0.0
        %755 = vmatpush2.msra.mxu0 0.0
        %756 = vmatprep.subr.mxu0 0.0
        %757 = vmatpush2.msra.mxu0 0.0
        %758 = vmatprep.subr.mxu0 0.0
        %759 = vmatpush2.msra.mxu0 0.0
        %760 = vmatprep.subr.mxu0 0.0
        %761 = vmatpush2.msra.mxu0 0.0
        %762 = vmatprep.mubr.f32.mxu0 0.0
        %763 = vmatmul.mubr.f32.gmra.mxu0 %v687
        %v764 = vpop.f32.mrf.mxu0
        %v765 = vadd.f32 %v669, %v764
        %v766 = vpop.f32.mrf.mxu0
        %767 = vmatprep.mubr.f32.mxu0 0.0
        %768 = vmatmul.mubr.f32.gmra.mxu0 %v690
        %v769 = vpop.f32.mrf.mxu0
        %v770 = vadd.f32 %v674, %v769
        %v771 = vpop.f32.mrf.mxu0
        %772 = vmatprep.mubr.f32.mxu0 0.0
        %773 = vmatmul.mubr.f32.gmra.mxu0 %v693
        %v774 = vpop.f32.mrf.mxu0
        %v775 = vadd.f32 %v679, %v774
        %v776 = vpop.f32.mrf.mxu0
        %777 = vmatprep.mubr.f32.mxu0 0.0
        %778 = vmatmul.mubr.f32.gmra.mxu0 %v696
        %v779 = vpop.f32.mrf.mxu0
        %v780 = vadd.f32 %v684, %v779
        %v781 = vpop.f32.mrf.mxu0
        %782 = vdwg.mxu0
        %v783 = vtanh.pop %v765
        %v784 = vtanh.pop %v770
        %v785 = vtanh.pop %v775
        %v786 = vtanh.pop %v780
        %v787 = vld [vmem:[%s7] sm:$0x1]
        %v788 = vld [vmem:[#allocation2] sm:$0x1]
        %790 = vset.pattern.permute.xlu0 0
        %791 = vperm.xlu0 %790, %v788
        %v792 = vpop.permute.xlu0 %791
        %v794 = vlaneseq
        %v795 = vshrl.u32 %v794, 7
        %v796 = vsub.s32 0, %v795
        %v797 = vrot.slane %v792, %v796
        %v799 = vsel %vm556, %v787, 0
        %801 = vmatprep.subr.mxu0 0.0
        %802 = vmatpush1.msra.mxu0 0.0
        %803 = vmatprep.subr.mxu0 0.0
        %804 = vmatpush1.msra.mxu0 0.0
        %805 = vmatprep.subr.mxu0 0.0
        %806 = vmatpush1.msra.mxu0 0.0
        %807 = vmatprep.subr.mxu0 0.0
        %808 = vmatpush1.msra.mxu0 0.0
        %809 = vmatprep.subr.mxu0 0.0
        %810 = vmatpush1.msra.mxu0 0.0
        %811 = vmatprep.subr.mxu0 0.0
        %812 = vmatpush1.msra.mxu0 0.0
        %813 = vmatprep.subr.mxu0 0.0
        %814 = vmatpush1.msra.mxu0 0.0
        %815 = vmatprep.subr.mxu0 0.0
        %816 = vmatpush1.msra.mxu0 0.0
        %817 = vmatprep.subr.mxu0 0.0
        %818 = vmatpush1.msra.mxu0 0.0
        %819 = vmatprep.subr.mxu0 0.0
        %820 = vmatpush1.msra.mxu0 0.0
        %821 = vmatprep.subr.mxu0 0.0
        %822 = vmatpush1.msra.mxu0 0.0
        %823 = vmatprep.subr.mxu0 0.0
        %824 = vmatpush1.msra.mxu0 0.0
        %825 = vmatprep.subr.mxu0 0.0
        %826 = vmatpush1.msra.mxu0 %v786
        %827 = vmatprep.subr.mxu0 0.0
        %828 = vmatpush1.msra.mxu0 %v785
        %829 = vmatprep.subr.mxu0 0.0
        %830 = vmatpush1.msra.mxu0 %v784
        %831 = vmatprep.subr.mxu0 0.0
        %832 = vmatpush1.msra.mxu0 %v783
        %833 = vmatprep.subr.mxu0 0.0
        %834 = vmatpush2.msra.mxu0 0.0
        %835 = vmatprep.subr.mxu0 0.0
        %836 = vmatpush2.msra.mxu0 0.0
        %837 = vmatprep.subr.mxu0 0.0
        %838 = vmatpush2.msra.mxu0 0.0
        %839 = vmatprep.subr.mxu0 0.0
        %840 = vmatpush2.msra.mxu0 0.0
        %841 = vmatprep.subr.mxu0 0.0
        %842 = vmatpush2.msra.mxu0 0.0
        %843 = vmatprep.subr.mxu0 0.0
        %844 = vmatpush2.msra.mxu0 0.0
        %845 = vmatprep.subr.mxu0 0.0
        %846 = vmatpush2.msra.mxu0 0.0
        %847 = vmatprep.subr.mxu0 0.0
        %848 = vmatpush2.msra.mxu0 0.0
        %849 = vmatprep.subr.mxu0 0.0
        %850 = vmatpush2.msra.mxu0 0.0
        %851 = vmatprep.subr.mxu0 0.0
        %852 = vmatpush2.msra.mxu0 0.0
        %853 = vmatprep.subr.mxu0 0.0
        %854 = vmatpush2.msra.mxu0 0.0
        %855 = vmatprep.subr.mxu0 0.0
        %856 = vmatpush2.msra.mxu0 0.0
        %857 = vmatprep.subr.mxu0 0.0
        %858 = vmatpush2.msra.mxu0 0.0
        %859 = vmatprep.subr.mxu0 0.0
        %860 = vmatpush2.msra.mxu0 0.0
        %861 = vmatprep.subr.mxu0 0.0
        %862 = vmatpush2.msra.mxu0 0.0
        %863 = vmatprep.subr.mxu0 0.0
        %864 = vmatpush2.msra.mxu0 0.0
        %865 = vmatprep.mubr.f32.mxu0 0.0
        %866 = vmatmul.mubr.f32.gmra.mxu0 %v799
        %v867 = vpop.f32.mrf.mxu0
        %v868 = vadd.f32 %v797, %v867
        %v869 = vpop.f32.mrf.mxu0
        %870 = vdwg.mxu0
        %871 = vst [vmem:[%s327] sm:$0x1] %v868
        %s872 = sand.u32 %s227, 1
        %s873 = scalar_lea.sflag [#allocation4], %s872
        %s874 = sand.u32 %s227, 1
        %s875 = scalar_lea.vmem [#allocation3], %s874
        // Predicated region
        $region57: #{tpu_custom_call.1} parent=55 // pred_check
          %p876 = pneg %p237
        $region58: #{tpu_custom_call.1} parent=55 // pred_check_branch
          %878 = sbr.rel (%p876) target = $region60
        $region59: #{tpu_custom_call.1} parent=55 // pred_region
          %s880 = ssub.s32 16, 16
          %881 = vsyncadd %s873, %s880
          %s882 = smul.addr %s25, 16
          %s883 = scalar_lea.hbm %s9, %s882
          %s885 = sshll.u32 %s875, 4
          %s886 = int_to_ptr.vmem [resolvable:$true] %s885
          %888 = dma.vmem_to_hbm [thread:$0]  %s886, 16, %s883, %s873
        $region60: #{tpu_custom_call.1} parent=55 // pred_fallthru
          _
      $region56: #{tpu_custom_call.1} parent=5 // pred_fallthru
        _
      %p889 = scmp.le.s32.totalorder 2, %s20
      // Predicated region
      $region61: #{tpu_custom_call.1} parent=5 // pred_check
        %p890 = pneg %p889
      $region62: #{tpu_custom_call.1} parent=5 // pred_check_branch
        %892 = sbr.rel (%p890) target = $region64
      $region63: #{tpu_custom_call.1} parent=5 // pred_region
        %s893 = ssub.s32 %s20, 2
        // Predicated region
        $region65: #{tpu_custom_call.1} parent=63 // pred_check
          %p894 = pneg %p243
        $region66: #{tpu_custom_call.1} parent=63 // pred_check_branch
          %896 = sbr.rel (%p894) target = $region68
        $region67: #{tpu_custom_call.1} parent=63 // pred_region
          %s897 = sand.u32 %s228, 1
          %s898 = scalar_lea.sflag [#allocation4], %s897
          %s899 = sand.u32 %s228, 1
          %s900 = scalar_lea.vmem [#allocation3], %s899
          %901 = dma.done %s898, 16
        $region68: #{tpu_custom_call.1} parent=63 // pred_fallthru
          _
      $region64: #{tpu_custom_call.1} parent=5 // pred_fallthru
        _
    $region6: #{tpu_custom_call.1} parent=1 // loop_footer
      %s24 = sadd.s32 1, %s20
    $region7: #{tpu_custom_call.1} parent=1 // loop_footer_branch
      %19 = sbr.rel target = $region3
    $region8: #{tpu_custom_call.1} parent=1 // loop_exit
      _
    %902 = vsyncpa [#allocation4], 1
    %s903 = scalar_lea.sflag [#allocation4], 1
    %904 = vsyncpa %s903, 1

</llo_original>
